<compile_context>
chip_gen: v7x
topology: tpu7x:2x2x1
jax: 0.10.0
libtpu: 0.0.40
codegen_flags: <defaults>
</compile_context>

<pallas_src>
import math

import numpy as np
import jax
import jax.numpy as jnp
from jax.experimental import pallas as pl
from jax.experimental.pallas import tpu as pltpu

KERNEL_SIZE = 7
PAD = (KERNEL_SIZE - 1) // 2


def _make_kernel(C, HW, tab_dim, half, wc_off):
    """Build the kernel body with the static shape constants closed over."""

    def kernel(x_ref, tab_ref, mlp_ref, big_ref, y_ref):
        xf = x_ref[...].astype(jnp.float32)            # (BB, C*HW), lane-dense
        tab = tab_ref[...].astype(jnp.float32)         # (BB, tab_dim)

        # ---- ChannelPool: per-pixel max / mean over the C channels ----------
        # (static unroll over C; for very large C a (BB, C, HW) sublane-reduce
        #  layout would be preferable)
        ch0 = xf[:, 0:HW]
        mx, sm = ch0, ch0
        for c in range(1, C):
            chc = xf[:, c * HW:(c + 1) * HW]
            mx = jnp.maximum(mx, chc)
            sm = sm + chc
        mean = sm * (1.0 / C)                          # (BB, HW)

        # ---- tab embedding: Linear -> ReLU -> Linear ------------------------
        w1 = mlp_ref[0:tab_dim, :]                     # (tab_dim, half)
        b1 = mlp_ref[tab_dim:tab_dim + 1, :]           # (1, half)
        h = jnp.maximum(
            jnp.dot(tab, w1, preferred_element_type=jnp.float32) + b1, 0.0)
        w2 = big_ref[0:half, :]                        # (half, HW)
        b2 = big_ref[half:half + 1, :]                 # (1, HW)
        emb = jnp.dot(h, w2, preferred_element_type=jnp.float32) + b2   # (BB, HW)

        # ---- 7x7 conv (pad 3) + folded BN, lowered to three MXU matmuls -----
        bconv = big_ref[half + 1:half + 2, :]          # (1, HW) broadcast bias row
        wc_max = big_ref[wc_off:wc_off + HW, :]        # (HW, HW)
        wc_mean = big_ref[wc_off + HW:wc_off + 2 * HW, :]
        wc_emb = big_ref[wc_off + 2 * HW:wc_off + 3 * HW, :]
        logits = (jnp.dot(mx, wc_max, preferred_element_type=jnp.float32)
                  + jnp.dot(mean, wc_mean, preferred_element_type=jnp.float32)
                  + jnp.dot(emb, wc_emb, preferred_element_type=jnp.float32)
                  + bconv)                             # (BB, HW)

        scale = jax.nn.sigmoid(logits)                 # (BB, HW)
        scale_full = jnp.concatenate([scale] * C, axis=-1)     # (BB, C*HW)
        y_ref[...] = (xf * scale_full).astype(y_ref.dtype)

    return kernel


def _fold_and_pack(params, H, W, tab_dim):
    """Host-side, weight-only preprocessing.

    Folds eval-mode BatchNorm into the conv, lowers the 7x7/pad-3 conv to a
    dense (3*HW, HW) matrix, and packs everything into two VMEM operands with
    8-sublane-aligned sections.
    """
    HW = H * W
    half = HW // 2

    s = np.asarray(params["bn_gamma"], np.float32) / np.sqrt(
        np.asarray(params["bn_var"], np.float32) + 1e-5)            # (1,)
    w_fold = np.asarray(params["wconv"], np.float32)[0] * s[0]      # (3, 7, 7)
    b_fold = float(params["bn_beta"][0] - params["bn_mean"][0] * s[0])

    # conv-as-matmul: logits[., i*W+j] = sum_m xcat_flat[., m] * Wc[m, i*W+j]
    Wc = np.zeros((3 * HW, HW), np.float32)
    for c in range(3):
        for i in range(H):
            for j in range(W):
                n = i * W + j
                for ki in range(KERNEL_SIZE):
                    p = i + ki - PAD
                    if 0 <= p < H:
                        for kj in range(KERNEL_SIZE):
                            q = j + kj - PAD
                            if 0 <= q < W:
                                Wc[c * HW + p * W + q, n] = w_fold[c, ki, kj]

    # pack 1: tab-MLP first layer  ->  (tab_dim + 1, half)
    mlp_pack = np.concatenate(
        [np.asarray(params["w1"], np.float32),
         np.asarray(params["b1"], np.float32).reshape(1, half)], axis=0)

    # pack 2: [w2 | b2 | conv bias | pad-to-8 | Wc]  ->  (wc_off + 3*HW, HW)
    wc_off = ((half + 2 + 7) // 8) * 8          # 8-row aligned start of Wc
    big_pack = np.zeros((wc_off + 3 * HW, HW), np.float32)
    big_pack[0:half] = np.asarray(params["w2"], np.float32)
    big_pack[half] = np.asarray(params["b2"], np.float32).reshape(HW)
    big_pack[half + 1] = b_fold
    big_pack[wc_off:] = Wc
    return jnp.asarray(mlp_pack), jnp.asarray(big_pack), wc_off


def spatial_gate(x, tab, params):
    B, C, H, W = x.shape
    HW = H * W
    tab_dim = tab.shape[-1]
    half = HW // 2

    mlp_pack, big_pack, wc_off = _fold_and_pack(params, H, W, tab_dim)

    # Batch chunk per grid step: whole batch when small, sublane-aligned chunks
    # otherwise (keeps the (8, 128) block constraint satisfied on the tab input).
    BB = B if B <= 8 else 8
    assert B % BB == 0, "batch must be a multiple of the batch chunk"
    grid = (B // BB,)

    x_flat = x.reshape(B, C * HW)               # lane-dense streaming layout
    kernel = _make_kernel(C, HW, tab_dim, half, wc_off)

    y_flat = pl.pallas_call(
        kernel,
        out_shape=jax.ShapeDtypeStruct((B, C * HW), x.dtype),
        grid=grid,
        in_specs=[
            pl.BlockSpec((BB, C * HW), lambda b: (b, 0)),
            pl.BlockSpec((BB, tab_dim), lambda b: (b, 0)),
            pl.BlockSpec(mlp_pack.shape, lambda b: (0, 0)),
            pl.BlockSpec(big_pack.shape, lambda b: (0, 0)),
        ],
        out_specs=pl.BlockSpec((BB, C * HW), lambda b: (b, 0)),
        compiler_params=pltpu.CompilerParams(
            dimension_semantics=("parallel",)),
    )(x_flat, tab, mlp_pack, big_pack)
    return y_flat.reshape(B, C, H, W)


def init_params(key, H, W, tab_dim):
    HW = H * W
    half = HW // 2
    ks = jax.random.split(key, 8)

    def lin(k, fan_in, shape):
        return jax.random.normal(k, shape, jnp.float32) / math.sqrt(fan_in)

    return dict(
        w1=lin(ks[0], tab_dim, (tab_dim, half)),
        b1=lin(ks[1], tab_dim, (half,)),
        w2=lin(ks[2], half, (half, HW)),
        b2=lin(ks[3], half, (HW,)),
        wconv=lin(ks[4], 3 * KERNEL_SIZE * KERNEL_SIZE,
                  (1, 3, KERNEL_SIZE, KERNEL_SIZE)),
        bn_gamma=1.0 + 0.1 * jax.random.normal(ks[5], (1,), jnp.float32),
        bn_beta=0.1 * jax.random.normal(ks[6], (1,), jnp.float32),
        bn_mean=0.1 * jax.random.normal(ks[7], (1,), jnp.float32),
        bn_var=jnp.ones((1,), jnp.float32),
    )


def reference(x, tab, params):
    """Pure-JAX mirror of the PyTorch SpatialGate forward (BN in eval mode)."""
    B, C, H, W = x.shape
    mx = jnp.max(x, axis=1, keepdims=True)
    mean = jnp.mean(x, axis=1, keepdims=True)
    emb = (jnp.maximum(tab @ params["w1"] + params["b1"], 0.0)
           @ params["w2"] + params["b2"])
    emb = emb.reshape(B, 1, H, W)
    xc = jnp.concatenate([mx, mean, emb], axis=1)              # (B, 3, H, W)
    conv = jax.lax.conv_general_dilated(
        xc, params["wconv"], window_strides=(1, 1),
        padding=[(PAD, PAD), (PAD, PAD)],
        dimension_numbers=("NCHW", "OIHW", "NCHW"))            # (B, 1, H, W)
    s = params["bn_gamma"] / jnp.sqrt(params["bn_var"] + 1e-5)
    bn = conv * s + (params["bn_beta"] - params["bn_mean"] * s)
    scale = jax.nn.sigmoid(bn)
    return x * scale


if __name__ == "__main__":
    B, C, H, W = 2, 4, 8, 8        # input_size=(8, 8), tab_dim=6: module defaults
    tab_dim = 6

    key = jax.random.PRNGKey(0)
    kx, kt, kp = jax.random.split(key, 3)
    x = jax.random.normal(kx, (B, C, H, W), jnp.float32)
    tab = jax.random.normal(kt, (B, tab_dim), jnp.float32)
    params = init_params(kp, H, W, tab_dim)

    y = jax.block_until_ready(spatial_gate(x, tab, params))
    y_ref = reference(x, tab, params)

    assert y.shape == x.shape
    err = float(jnp.max(jnp.abs(y - y_ref)))
    assert jnp.allclose(y, y_ref, atol=1e-4, rtol=1e-4), err
    print("KERNEL_OK")
</pallas_src>

<mosaic_0001>
module attributes {stable_mosaic.version = 11 : i64} {
  func.func @kernel(%arg0: i32, %arg1: memref<2x256xf32, #tpu.memory_space<vmem>>, %arg2: memref<2x6xf32, #tpu.memory_space<vmem>>, %arg3: memref<7x32xf32, #tpu.memory_space<vmem>>, %arg4: memref<232x64xf32, #tpu.memory_space<vmem>>, %arg5: memref<2x256xf32, #tpu.memory_space<vmem>>) attributes {dimension_semantics = [#tpu.dimension_semantics<parallel>], iteration_bounds = array<i64: 1>, scalar_prefetch = 0 : i64, scratch_operands = 0 : i64, tpu.core_type = #tpu.core_type<tc>, window_params = [{transform_indices = @transform_0, window_bounds = array<i64: 2, 256>}, {transform_indices = @transform_1, window_bounds = array<i64: 2, 6>}, {pipeline_mode = #tpu.pipeline_mode<synchronous>, transform_indices = @transform_2, window_bounds = array<i64: 7, 32>}, {pipeline_mode = #tpu.pipeline_mode<synchronous>, transform_indices = @transform_3, window_bounds = array<i64: 232, 64>}, {transform_indices = @transform_4, window_bounds = array<i64: 2, 256>}]} {
    %c0 = arith.constant 0 : index
    %c0_0 = arith.constant 0 : index
    %0 = vector.load %arg1[%c0, %c0_0] : memref<2x256xf32, #tpu.memory_space<vmem>>, vector<2x256xf32>
    %c0_1 = arith.constant 0 : index
    %c0_2 = arith.constant 0 : index
    %1 = vector.load %arg2[%c0_1, %c0_2] : memref<2x6xf32, #tpu.memory_space<vmem>>, vector<2x6xf32>
    %2 = vector.extract_strided_slice %0 {offsets = [0, 0], sizes = [2, 64], strides = [1, 1]} : vector<2x256xf32> to vector<2x64xf32>
    %3 = vector.extract_strided_slice %0 {offsets = [0, 64], sizes = [2, 64], strides = [1, 1]} : vector<2x256xf32> to vector<2x64xf32>
    %4 = arith.maximumf %2, %3 : vector<2x64xf32>
    %5 = arith.addf %2, %3 : vector<2x64xf32>
    %6 = vector.extract_strided_slice %0 {offsets = [0, 128], sizes = [2, 64], strides = [1, 1]} : vector<2x256xf32> to vector<2x64xf32>
    %7 = arith.maximumf %4, %6 : vector<2x64xf32>
    %8 = arith.addf %5, %6 : vector<2x64xf32>
    %9 = vector.extract_strided_slice %0 {offsets = [0, 192], sizes = [2, 64], strides = [1, 1]} : vector<2x256xf32> to vector<2x64xf32>
    %10 = arith.maximumf %7, %9 : vector<2x64xf32>
    %11 = arith.addf %8, %9 : vector<2x64xf32>
    %cst = arith.constant 2.500000e-01 : f32
    %12 = vector.broadcast %cst : f32 to vector<2x64xf32>
    %13 = arith.mulf %11, %12 : vector<2x64xf32>
    %c0_3 = arith.constant 0 : index
    %c0_4 = arith.constant 0 : index
    %14 = vector.load %arg3[%c0_3, %c0_4] : memref<7x32xf32, #tpu.memory_space<vmem>>, vector<6x32xf32>
    %c6 = arith.constant 6 : index
    %c0_5 = arith.constant 0 : index
    %15 = vector.load %arg3[%c6, %c0_5] : memref<7x32xf32, #tpu.memory_space<vmem>>, vector<1x32xf32>
    %cst_6 = arith.constant dense<0.000000e+00> : vector<2x32xf32>
    %16 = tpu.matmul %1, %14, %cst_6 {dimension_numbers = #tpu.dot_dimension_numbers<[1], [0], [0], [1], [0, 0, 1, 1], [], []>} : vector<2x6xf32>, vector<6x32xf32>, vector<2x32xf32> -> vector<2x32xf32>
    %17 = vector.broadcast %15 : vector<1x32xf32> to vector<2x32xf32>
    %18 = arith.addf %16, %17 : vector<2x32xf32>
    %cst_7 = arith.constant 0.000000e+00 : f32
    %19 = vector.broadcast %cst_7 : f32 to vector<2x32xf32>
    %20 = arith.maximumf %18, %19 : vector<2x32xf32>
    %c0_8 = arith.constant 0 : index
    %c0_9 = arith.constant 0 : index
    %21 = vector.load %arg4[%c0_8, %c0_9] : memref<232x64xf32, #tpu.memory_space<vmem>>, vector<32x64xf32>
    %c32 = arith.constant 32 : index
    %c0_10 = arith.constant 0 : index
    %22 = vector.load %arg4[%c32, %c0_10] : memref<232x64xf32, #tpu.memory_space<vmem>>, vector<1x64xf32>
    %cst_11 = arith.constant dense<0.000000e+00> : vector<2x64xf32>
    %23 = tpu.matmul %20, %21, %cst_11 {dimension_numbers = #tpu.dot_dimension_numbers<[1], [0], [0], [1], [0, 0, 1, 1], [], []>} : vector<2x32xf32>, vector<32x64xf32>, vector<2x64xf32> -> vector<2x64xf32>
    %24 = vector.broadcast %22 : vector<1x64xf32> to vector<2x64xf32>
    %25 = arith.addf %23, %24 : vector<2x64xf32>
    %c33 = arith.constant 33 : index
    %c0_12 = arith.constant 0 : index
    %26 = vector.load %arg4[%c33, %c0_12] : memref<232x64xf32, #tpu.memory_space<vmem>>, vector<1x64xf32>
    %c40 = arith.constant 40 : index
    %c0_13 = arith.constant 0 : index
    %27 = vector.load %arg4[%c40, %c0_13] : memref<232x64xf32, #tpu.memory_space<vmem>>, vector<64x64xf32>
    %c104 = arith.constant 104 : index
    %c0_14 = arith.constant 0 : index
    %28 = vector.load %arg4[%c104, %c0_14] : memref<232x64xf32, #tpu.memory_space<vmem>>, vector<64x64xf32>
    %c168 = arith.constant 168 : index
    %c0_15 = arith.constant 0 : index
    %29 = vector.load %arg4[%c168, %c0_15] : memref<232x64xf32, #tpu.memory_space<vmem>>, vector<64x64xf32>
    %cst_16 = arith.constant dense<0.000000e+00> : vector<2x64xf32>
    %30 = tpu.matmul %10, %27, %cst_16 {dimension_numbers = #tpu.dot_dimension_numbers<[1], [0], [0], [1], [0, 0, 1, 1], [], []>} : vector<2x64xf32>, vector<64x64xf32>, vector<2x64xf32> -> vector<2x64xf32>
    %cst_17 = arith.constant dense<0.000000e+00> : vector<2x64xf32>
    %31 = tpu.matmul %13, %28, %cst_17 {dimension_numbers = #tpu.dot_dimension_numbers<[1], [0], [0], [1], [0, 0, 1, 1], [], []>} : vector<2x64xf32>, vector<64x64xf32>, vector<2x64xf32> -> vector<2x64xf32>
    %32 = arith.addf %30, %31 : vector<2x64xf32>
    %cst_18 = arith.constant dense<0.000000e+00> : vector<2x64xf32>
    %33 = tpu.matmul %25, %29, %cst_18 {dimension_numbers = #tpu.dot_dimension_numbers<[1], [0], [0], [1], [0, 0, 1, 1], [], []>} : vector<2x64xf32>, vector<64x64xf32>, vector<2x64xf32> -> vector<2x64xf32>
    %34 = arith.addf %32, %33 : vector<2x64xf32>
    %35 = vector.broadcast %26 : vector<1x64xf32> to vector<2x64xf32>
    %36 = arith.addf %34, %35 : vector<2x64xf32>
    %37 = arith.negf %36 : vector<2x64xf32>
    %38 = math.exp %37 : vector<2x64xf32>
    %cst_19 = arith.constant 1.000000e+00 : f32
    %39 = vector.broadcast %cst_19 : f32 to vector<2x64xf32>
    %40 = arith.addf %39, %38 : vector<2x64xf32>
    %41 = arith.divf %39, %40 : vector<2x64xf32>
    %42 = tpu.concatenate %41, %41, %41, %41 in 1 : vector<2x64xf32>, vector<2x64xf32>, vector<2x64xf32>, vector<2x64xf32> -> vector<2x256xf32>
    %43 = arith.mulf %0, %42 : vector<2x256xf32>
    %c0_20 = arith.constant 0 : index
    %c0_21 = arith.constant 0 : index
    %44 = vector.load %arg5[%c0_20, %c0_21] : memref<2x256xf32, #tpu.memory_space<vmem>>, vector<2x256xf32>
    tpu.vector_store %arg5[%c0_20, %c0_21], %43 {strides = array<i32>} : memref<2x256xf32, #tpu.memory_space<vmem>>, vector<2x256xf32>,
    return
  }
  func.func @transform_0(%arg0: i32) -> (i32, i32) {
    %c0_i32 = arith.constant 0 : i32
    %c0_i32_0 = arith.constant 0 : i32
    return %arg0, %c0_i32 : i32, i32
  }
  func.func @transform_1(%arg0: i32) -> (i32, i32) {
    %c0_i32 = arith.constant 0 : i32
    %c0_i32_0 = arith.constant 0 : i32
    return %arg0, %c0_i32 : i32, i32
  }
  func.func @transform_2(%arg0: i32) -> (i32, i32) {
    %c0_i32 = arith.constant 0 : i32
    %c0_i32_0 = arith.constant 0 : i32
    %c0_i32_1 = arith.constant 0 : i32
    return %c0_i32, %c0_i32_0 : i32, i32
  }
  func.func @transform_3(%arg0: i32) -> (i32, i32) {
    %c0_i32 = arith.constant 0 : i32
    %c0_i32_0 = arith.constant 0 : i32
    %c0_i32_1 = arith.constant 0 : i32
    return %c0_i32, %c0_i32_0 : i32, i32
  }
  func.func @transform_4(%arg0: i32) -> (i32, i32) {
    %c0_i32 = arith.constant 0 : i32
    %c0_i32_0 = arith.constant 0 : i32
    return %arg0, %c0_i32 : i32, i32
  }
}

</mosaic_0001>

<llo_original>
// kernel: tpu_custom_call.1
$region0: #{tpu_custom_call.1}
  #allocation0 [shape = 'u32[]', space=smem, size = 0x4, offset = 0x4, fixed_abs, tag = 'smem constant byte address 0x4 - core index']
  #allocation1 [shape = 'u32[144,128]{1,0:T(1,128)}', space=vmem, size = 0x12000, scoped, tag = 'internal scratch']
  %s0 = inlined_call_operand.vmem [shape: f32[2,256], index: 0, kind: input, shape index: {}]
  %s1 = inlined_call_operand.vmem [shape: f32[2,6], index: 1, kind: input, shape index: {}]
  %s2 = inlined_call_operand.vmem [shape: f32[7,32], index: 2, kind: input, shape index: {}]
  %s3 = inlined_call_operand.vmem [shape: f32[232,64], index: 3, kind: input, shape index: {}]
  %s4 = inlined_call_operand.hbm [shape: f32[2,256], index: 4, kind: output, shape index: {}]
  %s5 = sld [smem:[#allocation0]]
  $region26: #{tpu_custom_call.1} parent=0
    _
  %s7 = ssub.s32 1, %s5
  %s8 = scalar_select 0, %s7, %s5
  $region1: #{tpu_custom_call.1} parent=0
    #allocation2 [shape = 'u8[2048]{0}', space=vmem, size = 0x800, scoped, tag = 'output window, operand 0, single buffered']
    #allocation3 [shape = 's32[1]{0}', space=sflag, size = 0x4, scoped, tag = 'scoped memory for tpu_custom_call.1']
    %9 = vsyncpa [#allocation3], 0
    // Predicated region
    $region2: #{tpu_custom_call.1} parent=1 // pred_check
      _
    $region3: #{tpu_custom_call.1} parent=1 // pred_check_branch
      %11 = sbr.rel (0) target = $region5
    $region4: #{tpu_custom_call.1} parent=1 // pred_region
      _
    $region5: #{tpu_custom_call.1} parent=1 // pred_fallthru
      _
    // Predicated region
    $region6: #{tpu_custom_call.1} parent=1 // pred_check
      _
    $region7: #{tpu_custom_call.1} parent=1 // pred_check_branch
      %13 = sbr.rel (0) target = $region9
    $region8: #{tpu_custom_call.1} parent=1 // pred_region
      _
    $region9: #{tpu_custom_call.1} parent=1 // pred_fallthru
      _
    // Predicated region
    $region10: #{tpu_custom_call.1} parent=1 // pred_check
      _
    $region11: #{tpu_custom_call.1} parent=1 // pred_check_branch
      %15 = sbr.rel (0) target = $region13
    $region12: #{tpu_custom_call.1} parent=1 // pred_region
      _
    $region13: #{tpu_custom_call.1} parent=1 // pred_fallthru
      _
    // Predicated region
    $region14: #{tpu_custom_call.1} parent=1 // pred_check
      _
    $region15: #{tpu_custom_call.1} parent=1 // pred_check_branch
      %17 = sbr.rel (0) target = $region17
    $region16: #{tpu_custom_call.1} parent=1 // pred_region
      _
    $region17: #{tpu_custom_call.1} parent=1 // pred_fallthru
      _
    %v18 = vld [vmem:[%s0] sm:$0xf]
    %v19 = vld [vmem:[%s1] sm:$0x3]
    %21 = vrot.lane.b32.xlu0 %v18, 64
    %v22 = vpop.permute.xlu0 %21
    %v24 = vmax.f32 %v18, %v22
    %v25 = vadd.f32 %v18, %v22
    %v26 = vrot.slane %v18, 2
    %v28 = vmax.f32 %v24, %v26
    %v29 = vadd.f32 %v25, %v26
    %v30 = vrot.slane %v22, 2
    %v32 = vmax.f32 %v28, %v30
    %v33 = vadd.f32 %v29, %v30
    %v34 = vmul.f32 %v33, 0.25
    %v35 = vld [vmem:[%s2] sm:$0x3f]
    %v36 = vld [vmem:[%s2 + $0x6] sm:$0x1]
    %v37 = vlaneseq
    %v38 = vshrl.u32 %v37, 7
    %v39 = vsub.s32 0, %v38
    %v40 = vrot.slane %v36, %v39
    %vm41 = vcmask 48128
    %v43 = vsel %vm41, %v19, 0
    %vm45 = vcmask 1045504
    %v47 = vsel %vm45, %v35, 0
    %49 = vmatprep.subr.mxu0 0.0
    %50 = vmatpush1.msra.mxu0 %v47
    %51 = vmatprep.subr.mxu0 0.0
    %52 = vmatpush1.msra.mxu0 0.0
    %53 = vmatprep.subr.mxu0 0.0
    %54 = vmatpush1.msra.mxu0 0.0
    %55 = vmatprep.subr.mxu0 0.0
    %56 = vmatpush1.msra.mxu0 0.0
    %57 = vmatprep.subr.mxu0 0.0
    %58 = vmatpush1.msra.mxu0 0.0
    %59 = vmatprep.subr.mxu0 0.0
    %60 = vmatpush1.msra.mxu0 0.0
    %61 = vmatprep.subr.mxu0 0.0
    %62 = vmatpush1.msra.mxu0 0.0
    %63 = vmatprep.subr.mxu0 0.0
    %64 = vmatpush1.msra.mxu0 0.0
    %65 = vmatprep.subr.mxu0 0.0
    %66 = vmatpush1.msra.mxu0 0.0
    %67 = vmatprep.subr.mxu0 0.0
    %68 = vmatpush1.msra.mxu0 0.0
    %69 = vmatprep.subr.mxu0 0.0
    %70 = vmatpush1.msra.mxu0 0.0
    %71 = vmatprep.subr.mxu0 0.0
    %72 = vmatpush1.msra.mxu0 0.0
    %73 = vmatprep.subr.mxu0 0.0
    %74 = vmatpush1.msra.mxu0 0.0
    %75 = vmatprep.subr.mxu0 0.0
    %76 = vmatpush1.msra.mxu0 0.0
    %77 = vmatprep.subr.mxu0 0.0
    %78 = vmatpush1.msra.mxu0 0.0
    %79 = vmatprep.subr.mxu0 0.0
    %80 = vmatpush1.msra.mxu0 0.0
    %81 = vmatprep.subr.mxu0 0.0
    %82 = vmatpush1.msra.mxu0 0.0
    %83 = vmatprep.subr.mxu0 0.0
    %84 = vmatpush1.msra.mxu0 0.0
    %85 = vmatprep.subr.mxu0 0.0
    %86 = vmatpush1.msra.mxu0 0.0
    %87 = vmatprep.subr.mxu0 0.0
    %88 = vmatpush1.msra.mxu0 0.0
    %89 = vmatprep.subr.mxu0 0.0
    %90 = vmatpush1.msra.mxu0 0.0
    %91 = vmatprep.subr.mxu0 0.0
    %92 = vmatpush1.msra.mxu0 0.0
    %93 = vmatprep.subr.mxu0 0.0
    %94 = vmatpush1.msra.mxu0 0.0
    %95 = vmatprep.subr.mxu0 0.0
    %96 = vmatpush1.msra.mxu0 0.0
    %97 = vmatprep.subr.mxu0 0.0
    %98 = vmatpush1.msra.mxu0 0.0
    %99 = vmatprep.subr.mxu0 0.0
    %100 = vmatpush1.msra.mxu0 0.0
    %101 = vmatprep.subr.mxu0 0.0
    %102 = vmatpush1.msra.mxu0 0.0
    %103 = vmatprep.subr.mxu0 0.0
    %104 = vmatpush1.msra.mxu0 0.0
    %105 = vmatprep.subr.mxu0 0.0
    %106 = vmatpush1.msra.mxu0 0.0
    %107 = vmatprep.subr.mxu0 0.0
    %108 = vmatpush1.msra.mxu0 0.0
    %109 = vmatprep.subr.mxu0 0.0
    %110 = vmatpush1.msra.mxu0 0.0
    %111 = vmatprep.subr.mxu0 0.0
    %112 = vmatpush1.msra.mxu0 0.0
    %113 = vmatprep.mubr.f32.mxu0 0.0
    %114 = vmatmul.mubr.f32.gmra.mrb[0].mxu0 %v43
    %v115 = vpop.f32.mrb[0].mxu0
    %v116 = vadd.f32 %v40, %v115
    %v117 = vpop.f32.mrb[0].mxu0
    %118 = vdwg.mxu0
    %v119 = vmax.f32 %v116, 0.0
    %v120 = vld [vmem:[%s3] sm:$0xff]
    %v121 = vld [vmem:[%s3 + $0x8] sm:$0xff]
    %v122 = vld [vmem:[%s3 + $0x10] sm:$0xff]
    %v123 = vld [vmem:[%s3 + $0x18] sm:$0xff]
    %v124 = vld [vmem:[%s3 + $0x20] sm:$0x1]
    %v125 = vlaneseq
    %v126 = vshrl.u32 %v125, 7
    %v127 = vsub.s32 0, %v126
    %v128 = vrot.slane %v124, %v127
    %vm129 = vcmask 261120
    %v131 = vsel %vm129, %v119, 0
    %133 = vmatprep.subr.mxu0 0.0
    %134 = vmatpush1.msra.mxu0 %v120
    %135 = vmatprep.subr.mxu0 0.0
    %136 = vmatpush1.msra.mxu0 %v121
    %137 = vmatprep.subr.mxu0 0.0
    %138 = vmatpush1.msra.mxu0 %v122
    %139 = vmatprep.subr.mxu0 0.0
    %140 = vmatpush1.msra.mxu0 %v123
    %141 = vmatprep.subr.mxu0 0.0
    %142 = vmatpush1.msra.mxu0 0.0
    %143 = vmatprep.subr.mxu0 0.0
    %144 = vmatpush1.msra.mxu0 0.0
    %145 = vmatprep.subr.mxu0 0.0
    %146 = vmatpush1.msra.mxu0 0.0
    %147 = vmatprep.subr.mxu0 0.0
    %148 = vmatpush1.msra.mxu0 0.0
    %149 = vmatprep.subr.mxu0 0.0
    %150 = vmatpush1.msra.mxu0 0.0
    %151 = vmatprep.subr.mxu0 0.0
    %152 = vmatpush1.msra.mxu0 0.0
    %153 = vmatprep.subr.mxu0 0.0
    %154 = vmatpush1.msra.mxu0 0.0
    %155 = vmatprep.subr.mxu0 0.0
    %156 = vmatpush1.msra.mxu0 0.0
    %157 = vmatprep.subr.mxu0 0.0
    %158 = vmatpush1.msra.mxu0 0.0
    %159 = vmatprep.subr.mxu0 0.0
    %160 = vmatpush1.msra.mxu0 0.0
    %161 = vmatprep.subr.mxu0 0.0
    %162 = vmatpush1.msra.mxu0 0.0
    %163 = vmatprep.subr.mxu0 0.0
    %164 = vmatpush1.msra.mxu0 0.0
    %165 = vmatprep.subr.mxu0 0.0
    %166 = vmatpush1.msra.mxu0 0.0
    %167 = vmatprep.subr.mxu0 0.0
    %168 = vmatpush1.msra.mxu0 0.0
    %169 = vmatprep.subr.mxu0 0.0
    %170 = vmatpush1.msra.mxu0 0.0
    %171 = vmatprep.subr.mxu0 0.0
    %172 = vmatpush1.msra.mxu0 0.0
    %173 = vmatprep.subr.mxu0 0.0
    %174 = vmatpush1.msra.mxu0 0.0
    %175 = vmatprep.subr.mxu0 0.0
    %176 = vmatpush1.msra.mxu0 0.0
    %177 = vmatprep.subr.mxu0 0.0
    %178 = vmatpush1.msra.mxu0 0.0
    %179 = vmatprep.subr.mxu0 0.0
    %180 = vmatpush1.msra.mxu0 0.0
    %181 = vmatprep.subr.mxu0 0.0
    %182 = vmatpush1.msra.mxu0 0.0
    %183 = vmatprep.subr.mxu0 0.0
    %184 = vmatpush1.msra.mxu0 0.0
    %185 = vmatprep.subr.mxu0 0.0
    %186 = vmatpush1.msra.mxu0 0.0
    %187 = vmatprep.subr.mxu0 0.0
    %188 = vmatpush1.msra.mxu0 0.0
    %189 = vmatprep.subr.mxu0 0.0
    %190 = vmatpush1.msra.mxu0 0.0
    %191 = vmatprep.subr.mxu0 0.0
    %192 = vmatpush1.msra.mxu0 0.0
    %193 = vmatprep.subr.mxu0 0.0
    %194 = vmatpush1.msra.mxu0 0.0
    %195 = vmatprep.subr.mxu0 0.0
    %196 = vmatpush1.msra.mxu0 0.0
    %197 = vmatprep.mubr.f32.mxu0 0.0
    %198 = vmatmul.mubr.f32.gmra.mrb[0].mxu0 %v131
    %v199 = vpop.f32.mrb[0].mxu0
    %v200 = vadd.f32 %v128, %v199
    %v201 = vpop.f32.mrb[0].mxu0
    %202 = vdwg.mxu0
    %v203 = vld [vmem:[%s3 + $0x21] sm:$0x1]
    %v204 = vld [vmem:[%s3 + $0x28] sm:$0xff]
    %v205 = vld [vmem:[%s3 + $0x30] sm:$0xff]
    %v206 = vld [vmem:[%s3 + $0x38] sm:$0xff]
    %v207 = vld [vmem:[%s3 + $0x40] sm:$0xff]
    %v208 = vld [vmem:[%s3 + $0x48] sm:$0xff]
    %v209 = vld [vmem:[%s3 + $0x50] sm:$0xff]
    %v210 = vld [vmem:[%s3 + $0x58] sm:$0xff]
    %v211 = vld [vmem:[%s3 + $0x60] sm:$0xff]
    %v212 = vld [vmem:[%s3 + $0x68] sm:$0xff]
    %v213 = vld [vmem:[%s3 + $0x70] sm:$0xff]
    %v214 = vld [vmem:[%s3 + $0x78] sm:$0xff]
    %v215 = vld [vmem:[%s3 + $0x80] sm:$0xff]
    %v216 = vld [vmem:[%s3 + $0x88] sm:$0xff]
    %v217 = vld [vmem:[%s3 + $0x90] sm:$0xff]
    %v218 = vld [vmem:[%s3 + $0x98] sm:$0xff]
    %v219 = vld [vmem:[%s3 + $0xa0] sm:$0xff]
    %v220 = vld [vmem:[%s3 + $0xa8] sm:$0xff]
    %v221 = vld [vmem:[%s3 + $0xb0] sm:$0xff]
    %v222 = vld [vmem:[%s3 + $0xb8] sm:$0xff]
    %v223 = vld [vmem:[%s3 + $0xc0] sm:$0xff]
    %v224 = vld [vmem:[%s3 + $0xc8] sm:$0xff]
    %v225 = vld [vmem:[%s3 + $0xd0] sm:$0xff]
    %v226 = vld [vmem:[%s3 + $0xd8] sm:$0xff]
    %v227 = vld [vmem:[%s3 + $0xe0] sm:$0xff]
    %vm228 = vcmask 523264
    %v230 = vsel %vm228, %v34, 0
    %232 = vmatprep.subr.mxu0 0.0
    %233 = vmatpush1.msra.mxu0 %v212
    %234 = vmatprep.subr.mxu0 0.0
    %235 = vmatpush1.msra.mxu0 %v213
    %236 = vmatprep.subr.mxu0 0.0
    %237 = vmatpush1.msra.mxu0 %v214
    %238 = vmatprep.subr.mxu0 0.0
    %239 = vmatpush1.msra.mxu0 %v215
    %240 = vmatprep.subr.mxu0 0.0
    %241 = vmatpush1.msra.mxu0 %v216
    %242 = vmatprep.subr.mxu0 0.0
    %243 = vmatpush1.msra.mxu0 %v217
    %244 = vmatprep.subr.mxu0 0.0
    %245 = vmatpush1.msra.mxu0 %v218
    %246 = vmatprep.subr.mxu0 0.0
    %247 = vmatpush1.msra.mxu0 %v219
    %248 = vmatprep.subr.mxu0 0.0
    %249 = vmatpush1.msra.mxu0 0.0
    %250 = vmatprep.subr.mxu0 0.0
    %251 = vmatpush1.msra.mxu0 0.0
    %252 = vmatprep.subr.mxu0 0.0
    %253 = vmatpush1.msra.mxu0 0.0
    %254 = vmatprep.subr.mxu0 0.0
    %255 = vmatpush1.msra.mxu0 0.0
    %256 = vmatprep.subr.mxu0 0.0
    %257 = vmatpush1.msra.mxu0 0.0
    %258 = vmatprep.subr.mxu0 0.0
    %259 = vmatpush1.msra.mxu0 0.0
    %260 = vmatprep.subr.mxu0 0.0
    %261 = vmatpush1.msra.mxu0 0.0
    %262 = vmatprep.subr.mxu0 0.0
    %263 = vmatpush1.msra.mxu0 0.0
    %264 = vmatprep.subr.mxu0 0.0
    %265 = vmatpush1.msra.mxu0 0.0
    %266 = vmatprep.subr.mxu0 0.0
    %267 = vmatpush1.msra.mxu0 0.0
    %268 = vmatprep.subr.mxu0 0.0
    %269 = vmatpush1.msra.mxu0 0.0
    %270 = vmatprep.subr.mxu0 0.0
    %271 = vmatpush1.msra.mxu0 0.0
    %272 = vmatprep.subr.mxu0 0.0
    %273 = vmatpush1.msra.mxu0 0.0
    %274 = vmatprep.subr.mxu0 0.0
    %275 = vmatpush1.msra.mxu0 0.0
    %276 = vmatprep.subr.mxu0 0.0
    %277 = vmatpush1.msra.mxu0 0.0
    %278 = vmatprep.subr.mxu0 0.0
    %279 = vmatpush1.msra.mxu0 0.0
    %280 = vmatprep.subr.mxu0 0.0
    %281 = vmatpush1.msra.mxu0 0.0
    %282 = vmatprep.subr.mxu0 0.0
    %283 = vmatpush1.msra.mxu0 0.0
    %284 = vmatprep.subr.mxu0 0.0
    %285 = vmatpush1.msra.mxu0 0.0
    %286 = vmatprep.subr.mxu0 0.0
    %287 = vmatpush1.msra.mxu0 0.0
    %288 = vmatprep.subr.mxu0 0.0
    %289 = vmatpush1.msra.mxu0 0.0
    %290 = vmatprep.subr.mxu0 0.0
    %291 = vmatpush1.msra.mxu0 0.0
    %292 = vmatprep.subr.mxu0 0.0
    %293 = vmatpush1.msra.mxu0 0.0
    %294 = vmatprep.subr.mxu0 0.0
    %295 = vmatpush1.msra.mxu0 0.0
    %296 = vmatprep.mubr.f32.mxu0 0.0
    %297 = vmatmul.mubr.f32.gmra.mrb[0].mxu0 %v230
    %v298 = vpop.f32.mrb[0].mxu0
    %v299 = vadd.f32 0.0, %v298
    %v300 = vpop.f32.mrb[0].mxu0
    %301 = vdwg.mxu0
    %v303 = vsel %vm228, %v32, 0
    %305 = vmatprep.subr.mxu0 0.0
    %306 = vmatpush1.msra.mxu0 %v204
    %307 = vmatprep.subr.mxu0 0.0
    %308 = vmatpush1.msra.mxu0 %v205
    %309 = vmatprep.subr.mxu0 0.0
    %310 = vmatpush1.msra.mxu0 %v206
    %311 = vmatprep.subr.mxu0 0.0
    %312 = vmatpush1.msra.mxu0 %v207
    %313 = vmatprep.subr.mxu0 0.0
    %314 = vmatpush1.msra.mxu0 %v208
    %315 = vmatprep.subr.mxu0 0.0
    %316 = vmatpush1.msra.mxu0 %v209
    %317 = vmatprep.subr.mxu0 0.0
    %318 = vmatpush1.msra.mxu0 %v210
    %319 = vmatprep.subr.mxu0 0.0
    %320 = vmatpush1.msra.mxu0 %v211
    %321 = vmatprep.subr.mxu0 0.0
    %322 = vmatpush1.msra.mxu0 0.0
    %323 = vmatprep.subr.mxu0 0.0
    %324 = vmatpush1.msra.mxu0 0.0
    %325 = vmatprep.subr.mxu0 0.0
    %326 = vmatpush1.msra.mxu0 0.0
    %327 = vmatprep.subr.mxu0 0.0
    %328 = vmatpush1.msra.mxu0 0.0
    %329 = vmatprep.subr.mxu0 0.0
    %330 = vmatpush1.msra.mxu0 0.0
    %331 = vmatprep.subr.mxu0 0.0
    %332 = vmatpush1.msra.mxu0 0.0
    %333 = vmatprep.subr.mxu0 0.0
    %334 = vmatpush1.msra.mxu0 0.0
    %335 = vmatprep.subr.mxu0 0.0
    %336 = vmatpush1.msra.mxu0 0.0
    %337 = vmatprep.subr.mxu0 0.0
    %338 = vmatpush1.msra.mxu0 0.0
    %339 = vmatprep.subr.mxu0 0.0
    %340 = vmatpush1.msra.mxu0 0.0
    %341 = vmatprep.subr.mxu0 0.0
    %342 = vmatpush1.msra.mxu0 0.0
    %343 = vmatprep.subr.mxu0 0.0
    %344 = vmatpush1.msra.mxu0 0.0
    %345 = vmatprep.subr.mxu0 0.0
    %346 = vmatpush1.msra.mxu0 0.0
    %347 = vmatprep.subr.mxu0 0.0
    %348 = vmatpush1.msra.mxu0 0.0
    %349 = vmatprep.subr.mxu0 0.0
    %350 = vmatpush1.msra.mxu0 0.0
    %351 = vmatprep.subr.mxu0 0.0
    %352 = vmatpush1.msra.mxu0 0.0
    %353 = vmatprep.subr.mxu0 0.0
    %354 = vmatpush1.msra.mxu0 0.0
    %355 = vmatprep.subr.mxu0 0.0
    %356 = vmatpush1.msra.mxu0 0.0
    %357 = vmatprep.subr.mxu0 0.0
    %358 = vmatpush1.msra.mxu0 0.0
    %359 = vmatprep.subr.mxu0 0.0
    %360 = vmatpush1.msra.mxu0 0.0
    %361 = vmatprep.subr.mxu0 0.0
    %362 = vmatpush1.msra.mxu0 0.0
    %363 = vmatprep.subr.mxu0 0.0
    %364 = vmatpush1.msra.mxu0 0.0
    %365 = vmatprep.subr.mxu0 0.0
    %366 = vmatpush1.msra.mxu0 0.0
    %367 = vmatprep.subr.mxu0 0.0
    %368 = vmatpush1.msra.mxu0 0.0
    %369 = vmatprep.mubr.f32.mxu0 0.0
    %370 = vmatmul.mubr.f32.gmra.mrb[0].mxu0 %v303
    %v371 = vpop.f32.mrb[0].mxu0
    %v372 = vadd.f32 %v299, %v371
    %v373 = vpop.f32.mrb[0].mxu0
    %374 = vdwg.mxu0
    %v376 = vsel %vm228, %v200, 0
    %378 = vmatprep.subr.mxu0 0.0
    %379 = vmatpush1.msra.mxu0 %v220
    %380 = vmatprep.subr.mxu0 0.0
    %381 = vmatpush1.msra.mxu0 %v221
    %382 = vmatprep.subr.mxu0 0.0
    %383 = vmatpush1.msra.mxu0 %v222
    %384 = vmatprep.subr.mxu0 0.0
    %385 = vmatpush1.msra.mxu0 %v223
    %386 = vmatprep.subr.mxu0 0.0
    %387 = vmatpush1.msra.mxu0 %v224
    %388 = vmatprep.subr.mxu0 0.0
    %389 = vmatpush1.msra.mxu0 %v225
    %390 = vmatprep.subr.mxu0 0.0
    %391 = vmatpush1.msra.mxu0 %v226
    %392 = vmatprep.subr.mxu0 0.0
    %393 = vmatpush1.msra.mxu0 %v227
    %394 = vmatprep.subr.mxu0 0.0
    %395 = vmatpush1.msra.mxu0 0.0
    %396 = vmatprep.subr.mxu0 0.0
    %397 = vmatpush1.msra.mxu0 0.0
    %398 = vmatprep.subr.mxu0 0.0
    %399 = vmatpush1.msra.mxu0 0.0
    %400 = vmatprep.subr.mxu0 0.0
    %401 = vmatpush1.msra.mxu0 0.0
    %402 = vmatprep.subr.mxu0 0.0
    %403 = vmatpush1.msra.mxu0 0.0
    %404 = vmatprep.subr.mxu0 0.0
    %405 = vmatpush1.msra.mxu0 0.0
    %406 = vmatprep.subr.mxu0 0.0
    %407 = vmatpush1.msra.mxu0 0.0
    %408 = vmatprep.subr.mxu0 0.0
    %409 = vmatpush1.msra.mxu0 0.0
    %410 = vmatprep.subr.mxu0 0.0
    %411 = vmatpush1.msra.mxu0 0.0
    %412 = vmatprep.subr.mxu0 0.0
    %413 = vmatpush1.msra.mxu0 0.0
    %414 = vmatprep.subr.mxu0 0.0
    %415 = vmatpush1.msra.mxu0 0.0
    %416 = vmatprep.subr.mxu0 0.0
    %417 = vmatpush1.msra.mxu0 0.0
    %418 = vmatprep.subr.mxu0 0.0
    %419 = vmatpush1.msra.mxu0 0.0
    %420 = vmatprep.subr.mxu0 0.0
    %421 = vmatpush1.msra.mxu0 0.0
    %422 = vmatprep.subr.mxu0 0.0
    %423 = vmatpush1.msra.mxu0 0.0
    %424 = vmatprep.subr.mxu0 0.0
    %425 = vmatpush1.msra.mxu0 0.0
    %426 = vmatprep.subr.mxu0 0.0
    %427 = vmatpush1.msra.mxu0 0.0
    %428 = vmatprep.subr.mxu0 0.0
    %429 = vmatpush1.msra.mxu0 0.0
    %430 = vmatprep.subr.mxu0 0.0
    %431 = vmatpush1.msra.mxu0 0.0
    %432 = vmatprep.subr.mxu0 0.0
    %433 = vmatpush1.msra.mxu0 0.0
    %434 = vmatprep.subr.mxu0 0.0
    %435 = vmatpush1.msra.mxu0 0.0
    %436 = vmatprep.subr.mxu0 0.0
    %437 = vmatpush1.msra.mxu0 0.0
    %438 = vmatprep.subr.mxu0 0.0
    %439 = vmatpush1.msra.mxu0 0.0
    %440 = vmatprep.subr.mxu0 0.0
    %441 = vmatpush1.msra.mxu0 0.0
    %442 = vmatprep.mubr.f32.mxu0 0.0
    %443 = vmatmul.mubr.f32.gmra.mrb[0].mxu0 %v376
    %v444 = vpop.f32.mrb[0].mxu0
    %v445 = vadd.f32 0.0, %v444
    %v446 = vpop.f32.mrb[0].mxu0
    %447 = vdwg.mxu0
    %v448 = vadd.f32 %v372, %v445
    %v449 = vlaneseq
    %v450 = vshrl.u32 %v449, 7
    %v451 = vsub.s32 0, %v450
    %v452 = vrot.slane %v203, %v451
    %v453 = vadd.f32 %v448, %v452
    %v454 = vxor.u32 %v453, 2147483648
    %v455 = vmul.f32 %v454, 1.442695
    %v456 = vpow.pop %v455
    %v457 = vadd.f32 %v456, 1.0
    %v458 = vrcp.pop %v457
    %v459 = vmul.f32 1.0, %v458
    %461 = vrot.lane.b32.xlu0 %v459, 64
    %v462 = vpop.permute.xlu0 %461
    %v464 = vsel %vm228, %v459, %v462
    %v466 = vcombine.low %v464, %v464
    %v468 = vunpack.c.l.s4 1983009808
    %v469 = vunpack.c.0.s8 %v468
    %v470 = vlaneseq
    %v471 = vshrl.u32 %v470, 7
    %v472 = vsub.s32 %v469, %v471
    %v473 = vrot.slane %v466, %v472
    %v475 = vmul.f32 %v18, %v473
    %476 = vst [vmem:[#allocation2] sm:$0xf] %v475
    // Predicated region
    $region18: #{tpu_custom_call.1} parent=1 // pred_check
      _
    $region19: #{tpu_custom_call.1} parent=1 // pred_check_branch
      %478 = sbr.rel (0) target = $region21
    $region20: #{tpu_custom_call.1} parent=1 // pred_region
      %s480 = ssub.s32 64, 64
      %481 = vsyncadd [#allocation3], %s480
      %s483 = sshll.u32 [#allocation2], 4
      %s484 = int_to_ptr.vmem [resolvable:$true] %s483
      %486 = dma.vmem_to_hbm [thread:$0]  %s484, 64, %s4, [#allocation3]
    $region21: #{tpu_custom_call.1} parent=1 // pred_fallthru
      _
    // Predicated region
    $region22: #{tpu_custom_call.1} parent=1 // pred_check
      _
    $region23: #{tpu_custom_call.1} parent=1 // pred_check_branch
      %488 = sbr.rel (0) target = $region25
    $region24: #{tpu_custom_call.1} parent=1 // pred_region
      %489 = dma.done [#allocation3], 64
    $region25: #{tpu_custom_call.1} parent=1 // pred_fallthru
      _
    %490 = vsyncpa [#allocation3], 1

</llo_original>
